<compile_context>
chip_gen: v5e
topology: v5e:2x2
jax: 0.10.0
libtpu: 0.0.40
codegen_flags: <defaults>
</compile_context>

<pallas_src>
import math

import numpy as np

import jax
import jax.numpy as jnp
from jax.experimental import pallas as pl
from jax.experimental.pallas import tpu as pltpu


# ---------------------------------------------------------------------------
# Phase 1: block-sparse tiled GraphConv  y = A @ (X @ W)  + per-tile BN stats.
# ---------------------------------------------------------------------------
def _graph_conv_kernel(ktab_ref, kvalid_ref,      # scalar prefetch (SMEM)
                       a_ref, xw_ref,             # inputs (VMEM, bf16)
                       y_ref, stats_ref,          # outputs (VMEM, bf16 / f32)
                       acc_ref):                  # scratch (VMEM, f32)
    i = pl.program_id(0)       # node row tile
    kb = pl.program_id(1)      # position in this row tile's nonzero-block list

    @pl.when(kb == 0)
    def _init():
        acc_ref[...] = jnp.zeros_like(acc_ref)

    # Padded table entries repeat the previous valid block index, so Pallas
    # issues no new DMA for them; this guard just skips the double-count.
    @pl.when(kvalid_ref[i, kb] != 0)
    def _accumulate():
        acc_ref[...] += jnp.dot(a_ref[...], xw_ref[...],
                                preferred_element_type=jnp.float32)

    @pl.when(kb == pl.num_programs(1) - 1)
    def _finalize():
        y = acc_ref[...]
        y_ref[...] = y.astype(y_ref.dtype)          # bf16 store (halves HBM write)
        # Per-row-tile partial BN statistics (from the f32 accumulator); folded
        # into global batch statistics outside the kernel.  Rows 2..7 of the
        # (8, C) stats block exist only for the min-tile constraint; never read.
        stats_ref[0:1, :] = jnp.sum(y, axis=0, keepdims=True)
        stats_ref[1:2, :] = jnp.sum(y * y, axis=0, keepdims=True)


# ---------------------------------------------------------------------------
# Phase 2: folded BatchNorm affine + ReLU (lane-dense, parallel over row tiles)
# ---------------------------------------------------------------------------
def _bn_relu_kernel(y_ref, ss_ref, o_ref):
    scale = ss_ref[0:1, :]
    shift = ss_ref[1:2, :]
    y = y_ref[...].astype(jnp.float32)
    o_ref[...] = jnp.maximum(y * scale + shift, 0.0).astype(o_ref.dtype)


# ---------------------------------------------------------------------------
# Graph-static preprocessing (host side, done once per graphtree depth).
# ---------------------------------------------------------------------------
def _block_column_table_host(adj_np, tm, tk):
    """Per row tile: indices of the k-tiles of `adj` containing any nonzero."""
    n = adj_np.shape[0]
    ri, ki = n // tm, n // tk
    blk = (adj_np.reshape(ri, tm, ki, tk) != 0).any(axis=(1, 3))      # (ri, ki)
    counts = blk.sum(axis=1).astype(np.int32)                         # (ri,)
    nb = max(int(counts.max()), 1)
    ktab = np.zeros((ri, nb), np.int32)
    kvalid = np.zeros((ri, nb), np.int32)
    for r in range(ri):
        cols = np.nonzero(blk[r])[0].astype(np.int32)
        if cols.size == 0:
            cols = np.array([0], np.int32)
        c = cols.size
        ktab[r, :c] = cols
        kvalid[r, :c] = 1
        # Padded entries repeat the last valid block -> same block index ->
        # Pallas skips the DMA entirely (no wasted HBM traffic / bubble).
        ktab[r, c:] = cols[-1]
    return ktab, kvalid, nb, int(counts.sum())


def prepare_adjacency(adj, tile=256):
    """Pad + bf16-cast A and build the block-column table. Call once per depth."""
    n = adj.shape[0]
    tm = tk = tile
    n_pad = pl.cdiv(n, tm) * tm
    adj_np = np.asarray(jax.device_get(adj), dtype=np.float32)
    adj_np = np.pad(adj_np, ((0, n_pad - n), (0, n_pad - n)))
    ktab, kvalid, nb, nnz_blocks = _block_column_table_host(adj_np, tm, tk)
    return dict(
        adj=jnp.asarray(adj_np, dtype=jnp.bfloat16),   # bf16 MXU feed
        ktab=jnp.asarray(ktab),
        kvalid=jnp.asarray(kvalid),
        nb=nb, nnz_blocks=nnz_blocks,
        n=n, n_pad=n_pad, tm=tm, tk=tk,
    )


def _pick_row_tile(n_pad, max_rows=1024):
    for cand in (1024, 512, 256, 128, 8):
        if cand <= max_rows and cand <= n_pad and n_pad % cand == 0:
            return cand
    return n_pad


# ---------------------------------------------------------------------------
# Forward pass.
# ---------------------------------------------------------------------------
def graph_conv_bn_relu(x, prep, w, gamma, beta, *, eps=1e-5):
    """x: [N, Cin] node features; prep: output of prepare_adjacency."""
    n, cin = x.shape
    cout = w.shape[1]
    assert n == prep["n"]
    tm, tk = prep["tm"], prep["tk"]
    n_pad, nb, ri = prep["n_pad"], prep["nb"], prep["n_pad"] // prep["tm"]

    cin_pad = pl.cdiv(cin, 128) * 128
    cout_pad = pl.cdiv(cout, 128) * 128          # lane-dense output block

    x_p = jnp.pad(x, ((0, n_pad - n), (0, cin_pad - cin))).astype(jnp.bfloat16)
    w_p = jnp.pad(w, ((0, cin_pad - cin), (0, cout_pad - cout))).astype(jnp.bfloat16)

    # Reassociation: y = A @ (X @ W).  XW is tiny -> plain XLA bf16 matmul with
    # f32 accumulation, re-quantized to bf16 as the MXU feed for the kernel.
    xw = jnp.dot(x_p, w_p, preferred_element_type=jnp.float32).astype(jnp.bfloat16)

    nnz = prep["nnz_blocks"]
    cost = pl.CostEstimate(
        flops=2 * nnz * tm * tk * cout_pad,
        transcendentals=0,
        bytes_accessed=(nnz * (tm * tk * 2 + tk * cout_pad * 2)
                        + ri * (tm * cout_pad * 2 + 8 * cout_pad * 4)),
    )

    grid_spec = pltpu.PrefetchScalarGridSpec(
        num_scalar_prefetch=2,
        grid=(ri, nb),
        in_specs=[
            pl.BlockSpec((tm, tk), lambda i, kb, kt, kv: (i, kt[i, kb])),
            pl.BlockSpec((tk, cout_pad), lambda i, kb, kt, kv: (kt[i, kb], 0)),
        ],
        out_specs=[
            pl.BlockSpec((tm, cout_pad), lambda i, kb, kt, kv: (i, 0)),
            pl.BlockSpec((8, cout_pad), lambda i, kb, kt, kv: (i, 0)),
        ],
        scratch_shapes=[pltpu.VMEM((tm, cout_pad), jnp.float32)],
    )
    y_full, stats = pl.pallas_call(
        _graph_conv_kernel,
        grid_spec=grid_spec,
        out_shape=(
            jax.ShapeDtypeStruct((n_pad, cout_pad), jnp.bfloat16),
            jax.ShapeDtypeStruct((ri * 8, cout_pad), jnp.float32),
        ),
        compiler_params=pltpu.CompilerParams(
            # Row tiles are independent -> shard across v7x's two TensorCores.
            dimension_semantics=("parallel", "arbitrary")),
        cost_estimate=cost,
    )(prep["ktab"], prep["kvalid"], prep["adj"], xw)

    # Fold global batch stats + BN affine into one (scale, shift) pair, O(Cout).
    # (Padded rows/channels contribute exact zeros to the sums.)
    stats = stats.reshape(ri, 8, cout_pad)
    col_sum = jnp.sum(stats[:, 0, :], axis=0)
    col_sumsq = jnp.sum(stats[:, 1, :], axis=0)
    mean = col_sum / n
    var = jnp.maximum(col_sumsq / n - mean * mean, 0.0)
    gamma_p = jnp.pad(gamma.reshape(-1), (0, cout_pad - cout), constant_values=1.0)
    beta_p = jnp.pad(beta.reshape(-1), (0, cout_pad - cout))
    scale = gamma_p * jax.lax.rsqrt(var + eps)
    shift = beta_p - mean * scale
    ss = jnp.stack([scale, shift], axis=0).astype(jnp.float32)     # (2, cout_pad)

    # Phase 2: mem-bound -> big lane-dense row blocks, bf16 read, f32 math.
    tr = _pick_row_tile(n_pad)
    out = pl.pallas_call(
        _bn_relu_kernel,
        grid=(n_pad // tr,),
        in_specs=[
            pl.BlockSpec((tr, cout_pad), lambda i: (i, 0)),
            pl.BlockSpec((2, cout_pad), lambda i: (0, 0)),
        ],
        out_specs=pl.BlockSpec((tr, cout_pad), lambda i: (i, 0)),
        out_shape=jax.ShapeDtypeStruct((n_pad, cout_pad), jnp.float32),
        compiler_params=pltpu.CompilerParams(dimension_semantics=("parallel",)),
    )(y_full, ss)

    return out[:n, :cout]


# ---------------------------------------------------------------------------
# Glue: deterministic parameters + a toy "graphtree" (banded ring graph).
# ---------------------------------------------------------------------------
def make_params(key, in_channels, out_channels):
    kw, kb, kg, kbt = jax.random.split(key, 4)
    bound = 1.0 / math.sqrt(in_channels)
    w = jax.random.uniform(kw, (in_channels, out_channels), jnp.float32,
                           -bound, bound)
    b = jax.random.uniform(kb, (1, out_channels), jnp.float32, -bound, bound)
    # Randomized affine exercises the folded BN; PyTorch init would be (1, 0).
    gamma = 1.0 + 0.1 * jax.random.normal(kg, (1, out_channels), jnp.float32)
    beta = 0.1 * jax.random.normal(kbt, (1, out_channels), jnp.float32)
    return w, b, gamma, beta


def make_graphtree_adjacency(num_nodes):
    """Ring graph (i ~ i±1, i±2) + self loops, GCN-normalized D^-1/2 A D^-1/2."""
    idx = jnp.arange(num_nodes)
    a = jnp.zeros((num_nodes, num_nodes), jnp.float32)
    for s in (1, 2):
        a = a.at[idx, (idx + s) % num_nodes].set(1.0)
        a = a.at[idx, (idx - s) % num_nodes].set(1.0)
    a = a + jnp.eye(num_nodes, dtype=jnp.float32)
    deg = jnp.sum(a, axis=1)
    d_inv_sqrt = 1.0 / jnp.sqrt(deg)
    return a * d_inv_sqrt[:, None] * d_inv_sqrt[None, :]


class GraphConvBnReluPallas:
    def __init__(self, in_channels, out_channels, key, tile=256):
        self.w, self.b, self.gamma, self.beta = make_params(
            key, in_channels, out_channels)
        self.tile = tile
        self._graph_cache = {}   # depth -> prepared adjacency (graph-static)

    def _prepare(self, graphtree, depth):
        if depth not in self._graph_cache:
            self._graph_cache[depth] = prepare_adjacency(graphtree[depth],
                                                         tile=self.tile)
        return self._graph_cache[depth]

    def __call__(self, data, graphtree, depth):
        prep = self._prepare(graphtree, depth)
        # Conv bias self.b is intentionally not passed: it is exactly cancelled
        # by the training-mode BN mean subtraction (output is unchanged).
        return graph_conv_bn_relu(data, prep, self.w, self.gamma, self.beta)


def reference_f32(x, adj, w, b, gamma, beta, eps=1e-5):
    hi = jax.lax.Precision.HIGHEST
    y = jnp.dot(jnp.dot(adj, x, precision=hi), w, precision=hi) + b
    mean = jnp.mean(y, axis=0, keepdims=True)
    var = jnp.mean((y - mean) ** 2, axis=0, keepdims=True)
    y = (y - mean) / jnp.sqrt(var + eps) * gamma + beta
    return jnp.maximum(y, 0.0)


if __name__ == "__main__":
    N, C_IN, C_OUT, DEPTH = 512, 16, 32, 3

    key = jax.random.PRNGKey(0)
    k_x, k_p = jax.random.split(key)

    x = jax.random.normal(k_x, (N, C_IN), jnp.float32)
    graphtree = {DEPTH: make_graphtree_adjacency(N)}

    module = GraphConvBnReluPallas(C_IN, C_OUT, k_p)
    out = module(x, graphtree, DEPTH)                  # first call builds cache
    out = module(x, graphtree, DEPTH)                  # steady-state path
    out = jax.block_until_ready(out)
    assert out.shape == (N, C_OUT)

    adj = graphtree[DEPTH]
    ref = reference_f32(x, adj, module.w, module.b, module.gamma, module.beta)
    assert jnp.allclose(out, ref, atol=5e-2, rtol=5e-2), \
        f"max diff vs f32 ref: {float(jnp.max(jnp.abs(out - ref)))}"
    print("KERNEL_OK")
</pallas_src>

<mosaic_0001>
module attributes {stable_mosaic.version = 11 : i64} {
  func.func @_graph_conv_kernel(%arg0: i32, %arg1: i32, %arg2: memref<2x2xi32, #tpu.memory_space<smem>>, %arg3: memref<2x2xi32, #tpu.memory_space<smem>>, %arg4: memref<256x256xbf16, #tpu.memory_space<vmem>>, %arg5: memref<256x128xbf16, #tpu.memory_space<vmem>>, %arg6: memref<256x128xbf16, #tpu.memory_space<vmem>>, %arg7: memref<8x128xf32, #tpu.memory_space<vmem>>, %arg8: memref<256x128xf32, #tpu.memory_space<vmem>>) attributes {dimension_semantics = [#tpu.dimension_semantics<parallel>, #tpu.dimension_semantics<arbitrary>], iteration_bounds = array<i64: 2, 2>, scalar_prefetch = 2 : i64, scratch_operands = 1 : i64, tpu.core_type = #tpu.core_type<tc>, window_params = [{transform_indices = @transform_0, window_bounds = array<i64: 256, 256>}, {transform_indices = @transform_1, window_bounds = array<i64: 256, 128>}, {transform_indices = @transform_2, window_bounds = array<i64: 256, 128>}, {transform_indices = @transform_3, window_bounds = array<i64: 8, 128>}]} {
    %c0_i32 = arith.constant 0 : i32
    %0 = arith.cmpi eq, %arg1, %c0_i32 : i32
    %1 = arith.extui %0 : i1 to i32
    %c0_i32_0 = arith.constant 0 : i32
    %2 = arith.cmpi ne, %1, %c0_i32_0 : i32
    scf.if %2 {
      %cst = arith.constant 0.000000e+00 : f32
      %12 = vector.broadcast %cst : f32 to vector<256x128xf32>
      %c0 = arith.constant 0 : index
      %c0_4 = arith.constant 0 : index
      %13 = vector.load %arg8[%c0, %c0_4] : memref<256x128xf32, #tpu.memory_space<vmem>>, vector<256x128xf32>
      tpu.vector_store %arg8[%c0, %c0_4], %12 {strides = array<i32>} : memref<256x128xf32, #tpu.memory_space<vmem>>, vector<256x128xf32>,
    } else {
    }
    %3 = arith.index_cast %arg0 : i32 to index
    %4 = arith.index_cast %arg1 : i32 to index
    %5 = memref.load %arg3[%3, %4] : memref<2x2xi32, #tpu.memory_space<smem>>
    %c0_i32_1 = arith.constant 0 : i32
    %6 = arith.cmpi ne, %5, %c0_i32_1 : i32
    %7 = arith.extui %6 : i1 to i32
    %c0_i32_2 = arith.constant 0 : i32
    %8 = arith.cmpi ne, %7, %c0_i32_2 : i32
    scf.if %8 {
      %c0 = arith.constant 0 : index
      %c0_4 = arith.constant 0 : index
      %12 = vector.load %arg8[%c0, %c0_4] : memref<256x128xf32, #tpu.memory_space<vmem>>, vector<256x128xf32>
      %c0_5 = arith.constant 0 : index
      %c0_6 = arith.constant 0 : index
      %13 = vector.load %arg4[%c0_5, %c0_6] : memref<256x256xbf16, #tpu.memory_space<vmem>>, vector<256x256xbf16>
      %c0_7 = arith.constant 0 : index
      %c0_8 = arith.constant 0 : index
      %14 = vector.load %arg5[%c0_7, %c0_8] : memref<256x128xbf16, #tpu.memory_space<vmem>>, vector<256x128xbf16>
      %cst = arith.constant dense<0.000000e+00> : vector<256x128xf32>
      %15 = tpu.matmul %13, %14, %cst {dimension_numbers = #tpu.dot_dimension_numbers<[1], [0], [0], [1], [0, 0, 1, 1], [], []>} : vector<256x256xbf16>, vector<256x128xbf16>, vector<256x128xf32> -> vector<256x128xf32>
      %16 = arith.addf %12, %15 : vector<256x128xf32>
      %c0_9 = arith.constant 0 : index
      %c0_10 = arith.constant 0 : index
      %17 = vector.load %arg8[%c0_9, %c0_10] : memref<256x128xf32, #tpu.memory_space<vmem>>, vector<256x128xf32>
      tpu.vector_store %arg8[%c0_9, %c0_10], %16 {strides = array<i32>} : memref<256x128xf32, #tpu.memory_space<vmem>>, vector<256x128xf32>,
    } else {
    }
    %c1_i32 = arith.constant 1 : i32
    %9 = arith.cmpi eq, %arg1, %c1_i32 : i32
    %10 = arith.extui %9 : i1 to i32
    %c0_i32_3 = arith.constant 0 : i32
    %11 = arith.cmpi ne, %10, %c0_i32_3 : i32
    scf.if %11 {
      %c0 = arith.constant 0 : index
      %c0_4 = arith.constant 0 : index
      %12 = vector.load %arg8[%c0, %c0_4] : memref<256x128xf32, #tpu.memory_space<vmem>>, vector<256x128xf32>
      %13 = arith.truncf %12 : vector<256x128xf32> to vector<256x128xbf16>
      %c0_5 = arith.constant 0 : index
      %c0_6 = arith.constant 0 : index
      %14 = vector.load %arg6[%c0_5, %c0_6] : memref<256x128xbf16, #tpu.memory_space<vmem>>, vector<256x128xbf16>
      tpu.vector_store %arg6[%c0_5, %c0_6], %13 {strides = array<i32>} : memref<256x128xbf16, #tpu.memory_space<vmem>>, vector<256x128xbf16>,
      %cst = arith.constant dense<0.000000e+00> : vector<128xf32>
      %15 = vector.multi_reduction <add>, %12, %cst [0] : vector<256x128xf32> to vector<128xf32>
      %16 = vector.shape_cast %15 : vector<128xf32> to vector<1x128xf32>
      %c0_7 = arith.constant 0 : index
      %c0_8 = arith.constant 0 : index
      %17 = vector.load %arg7[%c0_7, %c0_8] : memref<8x128xf32, #tpu.memory_space<vmem>>, vector<1x128xf32>
      tpu.vector_store %arg7[%c0_7, %c0_8], %16 {strides = array<i32>} : memref<8x128xf32, #tpu.memory_space<vmem>>, vector<1x128xf32>,
      %18 = arith.mulf %12, %12 : vector<256x128xf32>
      %cst_9 = arith.constant dense<0.000000e+00> : vector<128xf32>
      %19 = vector.multi_reduction <add>, %18, %cst_9 [0] : vector<256x128xf32> to vector<128xf32>
      %20 = vector.shape_cast %19 : vector<128xf32> to vector<1x128xf32>
      %c1 = arith.constant 1 : index
      %c0_10 = arith.constant 0 : index
      %21 = vector.load %arg7[%c1, %c0_10] : memref<8x128xf32, #tpu.memory_space<vmem>>, vector<1x128xf32>
      tpu.vector_store %arg7[%c1, %c0_10], %20 {strides = array<i32>} : memref<8x128xf32, #tpu.memory_space<vmem>>, vector<1x128xf32>,
    } else {
    }
    return
  }
  func.func @transform_0(%arg0: i32, %arg1: i32, %arg2: memref<2x2xi32, #tpu.memory_space<smem>>, %arg3: memref<2x2xi32, #tpu.memory_space<smem>>) -> (i32, i32) {
    %0 = arith.index_cast %arg0 : i32 to index
    %1 = arith.index_cast %arg1 : i32 to index
    %2 = memref.load %arg2[%0, %1] : memref<2x2xi32, #tpu.memory_space<smem>>
    %c0_i32 = arith.constant 0 : i32
    return %arg0, %2 : i32, i32
  }
  func.func @transform_1(%arg0: i32, %arg1: i32, %arg2: memref<2x2xi32, #tpu.memory_space<smem>>, %arg3: memref<2x2xi32, #tpu.memory_space<smem>>) -> (i32, i32) {
    %0 = arith.index_cast %arg0 : i32 to index
    %1 = arith.index_cast %arg1 : i32 to index
    %2 = memref.load %arg2[%0, %1] : memref<2x2xi32, #tpu.memory_space<smem>>
    %c0_i32 = arith.constant 0 : i32
    %c0_i32_0 = arith.constant 0 : i32
    return %2, %c0_i32 : i32, i32
  }
  func.func @transform_2(%arg0: i32, %arg1: i32, %arg2: memref<2x2xi32, #tpu.memory_space<smem>>, %arg3: memref<2x2xi32, #tpu.memory_space<smem>>) -> (i32, i32) {
    %c0_i32 = arith.constant 0 : i32
    %c0_i32_0 = arith.constant 0 : i32
    return %arg0, %c0_i32 : i32, i32
  }
  func.func @transform_3(%arg0: i32, %arg1: i32, %arg2: memref<2x2xi32, #tpu.memory_space<smem>>, %arg3: memref<2x2xi32, #tpu.memory_space<smem>>) -> (i32, i32) {
    %c0_i32 = arith.constant 0 : i32
    %c0_i32_0 = arith.constant 0 : i32
    return %arg0, %c0_i32 : i32, i32
  }
}

</mosaic_0001>

<llo_original>
// kernel: tpu_custom_call.1
$region0: #{tpu_custom_call.1}
  #allocation0 [shape = 'u32[]', space=smem, size = 0x4, offset = 0x4, fixed_abs, tag = 'smem constant byte address 0x4 - core index']
  #allocation1 [shape = 'u32[72,128]{1,0:T(1,128)}', space=vmem, size = 0x9000, scoped, tag = 'internal scratch']
  #allocation2 [shape = 'f32[256,128]{1,0:T(8,128)}', space=vmem, size = 0x20000, scoped, tag = 'scratch operand']
  #allocation3 [shape = 's32[1]{0}', space=sflag, size = 0x4, scoped, tag = 'scoped memory for tpu_custom_call.1']
  #allocation4 [shape = 'u8[1024]{0}', space=smem, size = 0x400, scoped, tag = 'prefetched SMEM operand 0']
  #allocation5 [shape = 'u8[1024]{0}', space=smem, size = 0x400, scoped, tag = 'prefetched SMEM operand 1']
  %s0 = inlined_call_operand.hbm [shape: s32[2,2], index: 0, kind: input, shape index: {}]
  %s1 = inlined_call_operand.hbm [shape: s32[2,2], index: 1, kind: input, shape index: {}]
  %s2 = inlined_call_operand.hbm [shape: bf16[512,512], index: 2, kind: input, shape index: {}]
  %s3 = inlined_call_operand.hbm [shape: bf16[512,128], index: 3, kind: input, shape index: {}]
  %s4 = inlined_call_operand.hbm [shape: bf16[512,128], index: 4, kind: output, shape index: {0}]
  %s5 = inlined_call_operand.hbm [shape: f32[16,128], index: 5, kind: output, shape index: {1}]
  %6 = xla_tuple %s4, %s5
  %s7 = sld [smem:[#allocation0]]
  $region69: #{tpu_custom_call.1} parent=0
    _
  %s9 = ssub.s32 1, %s7
  %s10 = scalar_select 0, %s9, %s7
  %s12 = sshll.u32 %s0, 4
  %s13 = int_to_ptr.hbm [resolvable:$true] %s12
  %15 = dma.hbm_to_smem %s13, 32, [#allocation4], [#allocation3]
  %s17 = sshll.u32 %s1, 4
  %s18 = int_to_ptr.hbm [resolvable:$true] %s17
  %20 = dma.hbm_to_smem %s18, 32, [#allocation5], [#allocation3]
  %22 = dma.done [#allocation3], 64
  %23 = sfence
  $region1: #{tpu_custom_call.1} parent=0
    #allocation6 [shape = 'u8[262144]{0}', space=vmem, size = 0x40000, scoped, tag = 'input window, operand 2']
    #allocation7 [shape = 's32[2]{0}', space=sflag, size = 0x8, scoped, tag = 'scoped memory for tpu_custom_call.1']
    #allocation8 [shape = 's32[2]{0}', space=sflag, size = 0x8, scoped, tag = 'scoped memory for tpu_custom_call.1']
    #allocation9 [shape = 'u8[131072]{0}', space=vmem, size = 0x20000, scoped, tag = 'input window, operand 3']
    #allocation10 [shape = 's32[2]{0}', space=sflag, size = 0x8, scoped, tag = 'scoped memory for tpu_custom_call.1']
    #allocation11 [shape = 'u8[131072]{0}', space=vmem, size = 0x20000, scoped, tag = 'output window, operand 0']
    #allocation12 [shape = 'u8[8192]{0}', space=vmem, size = 0x2000, scoped, tag = 'output window, operand 1']
    #allocation13 [shape = 's32[2]{0}', space=sflag, size = 0x8, scoped, tag = 'scoped memory for tpu_custom_call.1']
    %24 = vsyncpa [#allocation7], 0
    %s25 = scalar_lea.sflag [#allocation7], 1
    %26 = vsyncpa %s25, 0
    %27 = vsyncpa [#allocation10], 0
    %s28 = scalar_lea.sflag [#allocation10], 1
    %29 = vsyncpa %s28, 0
    %30 = vsyncpa [#allocation8], 0
    %s31 = scalar_lea.sflag [#allocation8], 1
    %32 = vsyncpa %s31, 0
    %33 = vsyncpa [#allocation13], 0
    %s34 = scalar_lea.sflag [#allocation13], 1
    %35 = vsyncpa %s34, 0
    loop: start=0, step=1, limit=6
    $region2: #{tpu_custom_call.1} parent=1 // loop_pre_header
      _
    $region3: #{tpu_custom_call.1} parent=1 // loop_header
      %s37 = sphi 0, %s41
      %p38 = scmp.ge.s32.totalorder %s37, 6
      %s44 = sphi 0, %s56
      %s45 = sphi 0, %s52
      %s46 = sphi 0, %s44
      %s47 = sphi 0, %s45
      %s48 = sphi 0, %s46
      %s49 = sphi 0, %s47
      %s77 = sphi 0, %s79
      %s80 = sphi 0, %s77
      %s81 = sphi 0, %s80
      %s97 = sphi 0, %s81
      %s119 = sphi 0, %s121
      %s122 = sphi 0, %s119
      %s123 = sphi 0, %s122
      %s139 = sphi 0, %s123
      %s145 = sphi 0, %s147
      %s148 = sphi 0, %s145
      %s149 = sphi 0, %s148
      %s165 = sphi 0, %s149
      %s171 = sphi 0, %s173
      %s174 = sphi 0, %s171
      %s175 = sphi 0, %s174
      %s191 = sphi 0, %s175
    $region4: #{tpu_custom_call.1} parent=1 // loop_header_branch
      %40 = sbr.rel (%p38) target = $region8
    $region5: #{tpu_custom_call.1} parent=1 // loop_body
      %s42 = ssub.s32 %s37, 1
      %s43 = ssub.s32 %s37, 2
      %s50 = sadd.s32 1, %s45
      %p51 = scmp.ge.s32.totalorder %s50, 2
      %s52 = scalar_select %p51, 0, %s50
      %s53 = sadd.s32 1, %s44
      %s54 = scalar_select %p51, %s53, %s44
      %p55 = scmp.ge.s32.totalorder %s54, 2
      %s56 = scalar_select %p55, 0, %s54
      %s57 = sshra.s32 %s45, 7
      %s58 = sand.u32 %s45, 127
      %s59 = sadd.s32 %s57, %s44
      %s60 = smul.u32 %s59, 128
      %s61 = sshra.s32 %s45, 7
      %s62 = sand.u32 %s45, 127
      %s63 = sadd.s32 %s60, %s62
      %s64 = sld [smem:[#allocation4 + %s63]]
      %s65 = sshra.s32 %s52, 7
      %s66 = sand.u32 %s52, 127
      %s67 = sadd.s32 %s65, %s56
      %s68 = smul.u32 %s67, 128
      %s69 = sshra.s32 %s52, 7
      %s70 = sand.u32 %s52, 127
      %s71 = sadd.s32 %s68, %s70
      %s72 = sld [smem:[#allocation4 + %s71]]
      %s73 = ssub.s32 %s44, %s56
      %s74 = ssub.s32 %s64, %s72
      %s75 = sor.u32 %s73, %s74
      %p76 = scmp.eq.s32.totalorder %s75, 0
      %s78 = sadd.s32 %s77, 1
      %s79 = scalar_select %p76, %s77, %s78
      %p82 = pneg %p76
      %p83 = scmp.eq.s32.totalorder %s37, 3
      %p84 = por %p82, %p83
      %p85 = scmp.ne.s32.totalorder %s77, %s80
      %p86 = scmp.eq.s32.totalorder %s37, 0
      %p87 = por %p85, %p86
      %p88 = scmp.ne.s32.totalorder %s77, %s80
      %p89 = scmp.eq.s32.totalorder %s42, 3
      %p90 = por %p88, %p89
      %p91 = scmp.ne.s32.totalorder %s80, %s81
      %p92 = scmp.eq.s32.totalorder %s42, 0
      %p93 = por %p91, %p92
      %p94 = scmp.ne.s32.totalorder %s80, %s81
      %p95 = scmp.eq.s32.totalorder %s43, 3
      %p96 = por %p94, %p95
      %p98 = scmp.ne.s32.totalorder %s81, %s97
      %p99 = scmp.eq.s32.totalorder %s43, 0
      %p100 = por %p98, %p99
      %s101 = sshra.s32 %s45, 7
      %s102 = sand.u32 %s45, 127
      %s103 = sadd.s32 %s101, %s44
      %s104 = smul.u32 %s103, 128
      %s105 = sshra.s32 %s45, 7
      %s106 = sand.u32 %s45, 127
      %s107 = sadd.s32 %s104, %s106
      %s108 = sld [smem:[#allocation4 + %s107]]
      %s109 = sshra.s32 %s52, 7
      %s110 = sand.u32 %s52, 127
      %s111 = sadd.s32 %s109, %s56
      %s112 = smul.u32 %s111, 128
      %s113 = sshra.s32 %s52, 7
      %s114 = sand.u32 %s52, 127
      %s115 = sadd.s32 %s112, %s114
      %s116 = sld [smem:[#allocation4 + %s115]]
      %s117 = ssub.s32 %s108, %s116
      %p118 = scmp.eq.s32.totalorder %s117, 0
      %s120 = sadd.s32 %s119, 1
      %s121 = scalar_select %p118, %s119, %s120
      %p124 = pneg %p118
      %p125 = scmp.eq.s32.totalorder %s37, 3
      %p126 = por %p124, %p125
      %p127 = scmp.ne.s32.totalorder %s119, %s122
      %p128 = scmp.eq.s32.totalorder %s37, 0
      %p129 = por %p127, %p128
      %p130 = scmp.ne.s32.totalorder %s119, %s122
      %p131 = scmp.eq.s32.totalorder %s42, 3
      %p132 = por %p130, %p131
      %p133 = scmp.ne.s32.totalorder %s122, %s123
      %p134 = scmp.eq.s32.totalorder %s42, 0
      %p135 = por %p133, %p134
      %p136 = scmp.ne.s32.totalorder %s122, %s123
      %p137 = scmp.eq.s32.totalorder %s43, 3
      %p138 = por %p136, %p137
      %p140 = scmp.ne.s32.totalorder %s123, %s139
      %p141 = scmp.eq.s32.totalorder %s43, 0
      %p142 = por %p140, %p141
      %s143 = ssub.s32 %s44, %s56
      %p144 = scmp.eq.s32.totalorder %s143, 0
      %s146 = sadd.s32 %s145, 1
      %s147 = scalar_select %p144, %s145, %s146
      %p150 = pneg %p144
      %p151 = scmp.eq.s32.totalorder %s37, 3
      %p152 = por %p150, %p151
      %p153 = scmp.ne.s32.totalorder %s145, %s148
      %p154 = scmp.eq.s32.totalorder %s37, 0
      %p155 = por %p153, %p154
      %p156 = scmp.ne.s32.totalorder %s145, %s148
      %p157 = scmp.eq.s32.totalorder %s42, 3
      %p158 = por %p156, %p157
      %p159 = scmp.ne.s32.totalorder %s148, %s149
      %p160 = scmp.eq.s32.totalorder %s42, 0
      %p161 = por %p159, %p160
      %p162 = scmp.ne.s32.totalorder %s148, %s149
      %p163 = scmp.eq.s32.totalorder %s43, 3
      %p164 = por %p162, %p163
      %p166 = scmp.ne.s32.totalorder %s149, %s165
      %p167 = scmp.eq.s32.totalorder %s43, 0
      %p168 = por %p166, %p167
      %s169 = ssub.s32 %s44, %s56
      %p170 = scmp.eq.s32.totalorder %s169, 0
      %s172 = sadd.s32 %s171, 1
      %s173 = scalar_select %p170, %s171, %s172
      %p176 = pneg %p170
      %p177 = scmp.eq.s32.totalorder %s37, 3
      %p178 = por %p176, %p177
      %p179 = scmp.ne.s32.totalorder %s171, %s174
      %p180 = scmp.eq.s32.totalorder %s37, 0
      %p181 = por %p179, %p180
      %p182 = scmp.ne.s32.totalorder %s171, %s174
      %p183 = scmp.eq.s32.totalorder %s42, 3
      %p184 = por %p182, %p183
      %p185 = scmp.ne.s32.totalorder %s174, %s175
      %p186 = scmp.eq.s32.totalorder %s42, 0
      %p187 = por %p185, %p186
      %p188 = scmp.ne.s32.totalorder %s174, %s175
      %p189 = scmp.eq.s32.totalorder %s43, 3
      %p190 = por %p188, %p189
      %p192 = scmp.ne.s32.totalorder %s175, %s191
      %p193 = scmp.eq.s32.totalorder %s43, 0
      %p194 = por %p192, %p193
      %p195 = scmp.le.s32.totalorder 1, %s37
      %p196 = scmp.lt.s32.totalorder %s37, 5
      %p197 = pnand %p195, %p196
      %p198 = pneg %p197
      // Predicated region
      $region9: #{tpu_custom_call.1} parent=5 // pred_check
        _
      $region10: #{tpu_custom_call.1} parent=5 // pred_check_branch
        %200 = sbr.rel (%p197) target = $region12
      $region11: #{tpu_custom_call.1} parent=5 // pred_region
        %s201 = ssub.s32 %s37, 1
      $region12: #{tpu_custom_call.1} parent=5 // pred_fallthru
        _
      %p202 = scmp.lt.s32.totalorder %s37, 4
      // Predicated region
      $region13: #{tpu_custom_call.1} parent=5 // pred_check
        %p203 = pneg %p202
      $region14: #{tpu_custom_call.1} parent=5 // pred_check_branch
        %205 = sbr.rel (%p203) target = $region16
      $region15: #{tpu_custom_call.1} parent=5 // pred_region
        // Predicated region
        $region17: #{tpu_custom_call.1} parent=15 // pred_check
          %p206 = pneg %p87
        $region18: #{tpu_custom_call.1} parent=15 // pred_check_branch
          %208 = sbr.rel (%p206) target = $region20
        $region19: #{tpu_custom_call.1} parent=15 // pred_region
          %s209 = sand.u32 %s77, 1
          %s210 = scalar_lea.sflag [#allocation7], %s209
          %s211 = sand.u32 %s77, 1
          %s212 = smul.addr %s211, 256
          %s213 = scalar_lea.vmem [#allocation6], %s212
          %s214 = sshra.s32 %s45, 7
          %s215 = sand.u32 %s45, 127
          %s216 = sadd.s32 %s214, %s44
          %s217 = smul.u32 %s216, 128
          %s218 = sshra.s32 %s45, 7
          %s219 = sand.u32 %s45, 127
          %s220 = sadd.s32 %s217, %s219
          %s221 = sld [smem:[#allocation4 + %s220]]
          %s222 = smul.u32 32, %s44
          %s223 = smul.u32 2, %s221
          %225 = vsyncadd %s210, 0
          %s226 = smul.addr %s222, 4
          %s227 = sadd.s32 %s223, %s226
          %s228 = smul.addr %s227, 4
          %s229 = scalar_lea.hbm %s2, %s228
          %s230 = sshll.u32 %s229, 4
          %s231 = int_to_ptr.hbm [resolvable:$true] %s230
          %s232 = sshll.u32 %s213, 4
          %s233 = int_to_ptr.vmem [resolvable:$true] %s232
          %238 = dma.hbm_to_vmem [thread:$0]  %s231, 4096, %s233, %s210, 256, 128, 8
        $region20: #{tpu_custom_call.1} parent=15 // pred_fallthru
          _
        // Predicated region
        $region21: #{tpu_custom_call.1} parent=15 // pred_check
          %p239 = pneg %p129
        $region22: #{tpu_custom_call.1} parent=15 // pred_check_branch
          %241 = sbr.rel (%p239) target = $region24
        $region23: #{tpu_custom_call.1} parent=15 // pred_region
          %s242 = sand.u32 %s119, 1
          %s243 = scalar_lea.sflag [#allocation10], %s242
          %s244 = sand.u32 %s119, 1
          %s245 = smul.addr %s244, 128
          %s246 = scalar_lea.vmem [#allocation9], %s245
          %s247 = sshra.s32 %s45, 7
          %s248 = sand.u32 %s45, 127
          %s249 = sadd.s32 %s247, %s44
          %s250 = smul.u32 %s249, 128
          %s251 = sshra.s32 %s45, 7
          %s252 = sand.u32 %s45, 127
          %s253 = sadd.s32 %s250, %s252
          %s254 = sld [smem:[#allocation4 + %s253]]
          %s255 = smul.u32 32, %s254
          %257 = vsyncadd %s243, 0
          %s258 = smul.addr %s255, 4
          %s259 = scalar_lea.hbm %s3, %s258
          %s260 = sshll.u32 %s259, 4
          %s261 = int_to_ptr.hbm [resolvable:$true] %s260
          %s262 = sshll.u32 %s246, 4
          %s263 = int_to_ptr.vmem [resolvable:$true] %s262
          %268 = dma.hbm_to_vmem [thread:$0]  %s261, 2048, %s263, %s243, 64, 64, 4
        $region24: #{tpu_custom_call.1} parent=15 // pred_fallthru
          _
      $region16: #{tpu_custom_call.1} parent=5 // pred_fallthru
        _
      %p269 = scmp.le.s32.totalorder 1, %s37
      %p270 = scmp.lt.s32.totalorder %s37, 5
      %p271 = pnand %p269, %p270
      %p272 = pneg %p271
      // Predicated region
      $region25: #{tpu_custom_call.1} parent=5 // pred_check
        _
      $region26: #{tpu_custom_call.1} parent=5 // pred_check_branch
        %274 = sbr.rel (%p271) target = $region28
      $region27: #{tpu_custom_call.1} parent=5 // pred_region
        %s275 = ssub.s32 %s37, 1
        %s276 = sand.u32 %s80, 1
        %s277 = scalar_lea.sflag [#allocation7], %s276
        %s278 = sand.u32 %s80, 1
        %s279 = smul.addr %s278, 256
        %s280 = scalar_lea.vmem [#allocation6], %s279
        // Predicated region
        $region29: #{tpu_custom_call.1} parent=27 // pred_check
          %p281 = pneg %p93
        $region30: #{tpu_custom_call.1} parent=27 // pred_check_branch
          %283 = sbr.rel (%p281) target = $region32
        $region31: #{tpu_custom_call.1} parent=27 // pred_region
          %285 = dma.done %s277, 4096
        $region32: #{tpu_custom_call.1} parent=27 // pred_fallthru
          _
        %s286 = sand.u32 %s122, 1
        %s287 = scalar_lea.sflag [#allocation10], %s286
        %s288 = sand.u32 %s122, 1
        %s289 = smul.addr %s288, 128
        %s290 = scalar_lea.vmem [#allocation9], %s289
        // Predicated region
        $region33: #{tpu_custom_call.1} parent=27 // pred_check
          %p291 = pneg %p135
        $region34: #{tpu_custom_call.1} parent=27 // pred_check_branch
          %293 = sbr.rel (%p291) target = $region36
        $region35: #{tpu_custom_call.1} parent=27 // pred_region
          %295 = dma.done %s287, 2048
        $region36: #{tpu_custom_call.1} parent=27 // pred_fallthru
          _
        %s296 = sand.u32 %s80, 1
        %s297 = scalar_lea.sflag [#allocation7], %s296
        %s298 = sand.u32 %s80, 1
        %s299 = smul.addr %s298, 256
        %s300 = scalar_lea.vmem [#allocation6], %s299
        %p301 = pneg %p93
        %p302 = pneg %p90
        %s303 = sand.u32 %s122, 1
        %s304 = scalar_lea.sflag [#allocation10], %s303
        %s305 = sand.u32 %s122, 1
        %s306 = smul.addr %s305, 128
        %s307 = scalar_lea.vmem [#allocation9], %s306
        %p308 = pneg %p135
        %p309 = pneg %p132
        %p310 = pneg %p161
        %p311 = pneg %p158
        %s312 = sand.u32 %s148, 1
        %s313 = scalar_lea.sflag [#allocation8], %s312
        %s314 = sand.u32 %s148, 1
        %s315 = smul.addr %s314, 128
        %s316 = scalar_lea.vmem [#allocation11], %s315
        %p317 = pneg %p187
        %p318 = pneg %p184
        %s319 = sand.u32 %s174, 1
        %s320 = scalar_lea.sflag [#allocation13], %s319
        %s321 = sand.u32 %s174, 1
        %s322 = smul.addr %s321, 8
        %s323 = scalar_lea.vmem [#allocation12], %s322
        %s324 = sshra.s32 %s47, 7
        %s325 = sand.u32 %s47, 127
        %s326 = sadd.s32 %s324, %s46
        %s327 = smul.u32 %s326, 128
        %s328 = sshra.s32 %s47, 7
        %s329 = sand.u32 %s47, 127
        %s330 = sadd.s32 %s327, %s329
        %s331 = sld [smem:[#allocation4 + %s330]]
        %s332 = smul.u32 32, %s46
        %s333 = smul.u32 2, %s331
        %s334 = sshra.s32 %s47, 7
        %s335 = sand.u32 %s47, 127
        %s336 = sadd.s32 %s334, %s46
        %s337 = smul.u32 %s336, 128
        %s338 = sshra.s32 %s47, 7
        %s339 = sand.u32 %s47, 127
        %s340 = sadd.s32 %s337, %s339
        %s341 = sld [smem:[#allocation4 + %s340]]
        %s342 = smul.u32 32, %s341
        %s343 = smul.u32 32, %s46
        %p344 = scmp.eq.s32.totalorder %s47, 0
        // Predicated region
        $region37: #{tpu_custom_call.1} parent=27 // pred_check
          %p345 = pneg %p344
        $region38: #{tpu_custom_call.1} parent=27 // pred_check_branch
          %347 = sbr.rel (%p345) target = $region40
        $region39: #{tpu_custom_call.1} parent=27 // pred_region
          %348 = vst [vmem:[#allocation2] sm:$0xff] 0.0
          %349 = vst [vmem:[#allocation2 + $0x8] sm:$0xff] 0.0
          %350 = vst [vmem:[#allocation2 + $0x10] sm:$0xff] 0.0
          %351 = vst [vmem:[#allocation2 + $0x18] sm:$0xff] 0.0
          %352 = vst [vmem:[#allocation2 + $0x20] sm:$0xff] 0.0
          %353 = vst [vmem:[#allocation2 + $0x28] sm:$0xff] 0.0
          %354 = vst [vmem:[#allocation2 + $0x30] sm:$0xff] 0.0
          %355 = vst [vmem:[#allocation2 + $0x38] sm:$0xff] 0.0
          %356 = vst [vmem:[#allocation2 + $0x40] sm:$0xff] 0.0
          %357 = vst [vmem:[#allocation2 + $0x48] sm:$0xff] 0.0
          %358 = vst [vmem:[#allocation2 + $0x50] sm:$0xff] 0.0
          %359 = vst [vmem:[#allocation2 + $0x58] sm:$0xff] 0.0
          %360 = vst [vmem:[#allocation2 + $0x60] sm:$0xff] 0.0
          %361 = vst [vmem:[#allocation2 + $0x68] sm:$0xff] 0.0
          %362 = vst [vmem:[#allocation2 + $0x70] sm:$0xff] 0.0
          %363 = vst [vmem:[#allocation2 + $0x78] sm:$0xff] 0.0
          %364 = vst [vmem:[#allocation2 + $0x80] sm:$0xff] 0.0
          %365 = vst [vmem:[#allocation2 + $0x88] sm:$0xff] 0.0
          %366 = vst [vmem:[#allocation2 + $0x90] sm:$0xff] 0.0
          %367 = vst [vmem:[#allocation2 + $0x98] sm:$0xff] 0.0
          %368 = vst [vmem:[#allocation2 + $0xa0] sm:$0xff] 0.0
          %369 = vst [vmem:[#allocation2 + $0xa8] sm:$0xff] 0.0
          %370 = vst [vmem:[#allocation2 + $0xb0] sm:$0xff] 0.0
          %371 = vst [vmem:[#allocation2 + $0xb8] sm:$0xff] 0.0
          %372 = vst [vmem:[#allocation2 + $0xc0] sm:$0xff] 0.0
          %373 = vst [vmem:[#allocation2 + $0xc8] sm:$0xff] 0.0
          %374 = vst [vmem:[#allocation2 + $0xd0] sm:$0xff] 0.0
          %375 = vst [vmem:[#allocation2 + $0xd8] sm:$0xff] 0.0
          %376 = vst [vmem:[#allocation2 + $0xe0] sm:$0xff] 0.0
          %377 = vst [vmem:[#allocation2 + $0xe8] sm:$0xff] 0.0
          %378 = vst [vmem:[#allocation2 + $0xf0] sm:$0xff] 0.0
          %379 = vst [vmem:[#allocation2 + $0xf8] sm:$0xff] 0.0
        $region40: #{tpu_custom_call.1} parent=27 // pred_fallthru
          _
        %s380 = sshra.s32 %s47, 7
        %s381 = sand.u32 %s47, 127
        %s382 = sadd.s32 %s380, %s46
        %s383 = smul.u32 %s382, 128
        %s384 = sshra.s32 %s47, 7
        %s385 = sand.u32 %s47, 127
        %s386 = sadd.s32 %s383, %s385
        %s387 = sld [smem:[#allocation5 + %s386]]
        %p388 = scmp.ne.s32.totalorder %s387, 0
        // Predicated region
        $region41: #{tpu_custom_call.1} parent=27 // pred_check
          %p389 = pneg %p388
        $region42: #{tpu_custom_call.1} parent=27 // pred_check_branch
          %391 = sbr.rel (%p389) target = $region44
        $region43: #{tpu_custom_call.1} parent=27 // pred_region
          %v392 = vld [vmem:[#allocation2] sm:$0xff]
          %v393 = vld [vmem:[#allocation2 + $0x8] sm:$0xff]
          %v394 = vld [vmem:[#allocation2 + $0x10] sm:$0xff]
          %v395 = vld [vmem:[#allocation2 + $0x18] sm:$0xff]
          %v396 = vld [vmem:[#allocation2 + $0x20] sm:$0xff]
          %v397 = vld [vmem:[#allocation2 + $0x28] sm:$0xff]
          %v398 = vld [vmem:[#allocation2 + $0x30] sm:$0xff]
          %v399 = vld [vmem:[#allocation2 + $0x38] sm:$0xff]
          %v400 = vld [vmem:[#allocation2 + $0x40] sm:$0xff]
          %v401 = vld [vmem:[#allocation2 + $0x48] sm:$0xff]
          %v402 = vld [vmem:[#allocation2 + $0x50] sm:$0xff]
          %v403 = vld [vmem:[#allocation2 + $0x58] sm:$0xff]
          %v404 = vld [vmem:[#allocation2 + $0x60] sm:$0xff]
          %v405 = vld [vmem:[#allocation2 + $0x68] sm:$0xff]
          %v406 = vld [vmem:[#allocation2 + $0x70] sm:$0xff]
          %v407 = vld [vmem:[#allocation2 + $0x78] sm:$0xff]
          %v408 = vld [vmem:[#allocation2 + $0x80] sm:$0xff]
          %v409 = vld [vmem:[#allocation2 + $0x88] sm:$0xff]
          %v410 = vld [vmem:[#allocation2 + $0x90] sm:$0xff]
          %v411 = vld [vmem:[#allocation2 + $0x98] sm:$0xff]
          %v412 = vld [vmem:[#allocation2 + $0xa0] sm:$0xff]
          %v413 = vld [vmem:[#allocation2 + $0xa8] sm:$0xff]
          %v414 = vld [vmem:[#allocation2 + $0xb0] sm:$0xff]
          %v415 = vld [vmem:[#allocation2 + $0xb8] sm:$0xff]
          %v416 = vld [vmem:[#allocation2 + $0xc0] sm:$0xff]
          %v417 = vld [vmem:[#allocation2 + $0xc8] sm:$0xff]
          %v418 = vld [vmem:[#allocation2 + $0xd0] sm:$0xff]
          %v419 = vld [vmem:[#allocation2 + $0xd8] sm:$0xff]
          %v420 = vld [vmem:[#allocation2 + $0xe0] sm:$0xff]
          %v421 = vld [vmem:[#allocation2 + $0xe8] sm:$0xff]
          %v422 = vld [vmem:[#allocation2 + $0xf0] sm:$0xff]
          %v423 = vld [vmem:[#allocation2 + $0xf8] sm:$0xff]
          %v424 = vld [vmem:[%s280] sm:$0xff]
          %v425 = vld [vmem:[%s280 + $0x8] sm:$0xff]
          %v426 = vld [vmem:[%s280 + $0x10] sm:$0xff]
          %v427 = vld [vmem:[%s280 + $0x18] sm:$0xff]
          %v428 = vld [vmem:[%s280 + $0x20] sm:$0xff]
          %v429 = vld [vmem:[%s280 + $0x28] sm:$0xff]
          %v430 = vld [vmem:[%s280 + $0x30] sm:$0xff]
          %v431 = vld [vmem:[%s280 + $0x38] sm:$0xff]
          %v432 = vld [vmem:[%s280 + $0x40] sm:$0xff]
          %v433 = vld [vmem:[%s280 + $0x48] sm:$0xff]
          %v434 = vld [vmem:[%s280 + $0x50] sm:$0xff]
          %v435 = vld [vmem:[%s280 + $0x58] sm:$0xff]
          %v436 = vld [vmem:[%s280 + $0x60] sm:$0xff]
          %v437 = vld [vmem:[%s280 + $0x68] sm:$0xff]
          %v438 = vld [vmem:[%s280 + $0x70] sm:$0xff]
          %v439 = vld [vmem:[%s280 + $0x78] sm:$0xff]
          %v440 = vld [vmem:[%s280 + $0x80] sm:$0xff]
          %v441 = vld [vmem:[%s280 + $0x88] sm:$0xff]
          %v442 = vld [vmem:[%s280 + $0x90] sm:$0xff]
          %v443 = vld [vmem:[%s280 + $0x98] sm:$0xff]
          %v444 = vld [vmem:[%s280 + $0xa0] sm:$0xff]
          %v445 = vld [vmem:[%s280 + $0xa8] sm:$0xff]
          %v446 = vld [vmem:[%s280 + $0xb0] sm:$0xff]
          %v447 = vld [vmem:[%s280 + $0xb8] sm:$0xff]
          %v448 = vld [vmem:[%s280 + $0xc0] sm:$0xff]
          %v449 = vld [vmem:[%s280 + $0xc8] sm:$0xff]
          %v450 = vld [vmem:[%s280 + $0xd0] sm:$0xff]
          %v451 = vld [vmem:[%s280 + $0xd8] sm:$0xff]
          %v452 = vld [vmem:[%s280 + $0xe0] sm:$0xff]
          %v453 = vld [vmem:[%s280 + $0xe8] sm:$0xff]
          %v454 = vld [vmem:[%s280 + $0xf0] sm:$0xff]
          %v455 = vld [vmem:[%s280 + $0xf8] sm:$0xff]
          %v456 = vld [vmem:[%s290] sm:$0xf]
          %v457 = vld [vmem:[%s290 + $0x4] sm:$0xf]
          %v458 = vld [vmem:[%s290 + $0x8] sm:$0xf]
          %v459 = vld [vmem:[%s290 + $0xc] sm:$0xf]
          %v460 = vld [vmem:[%s290 + $0x10] sm:$0xf]
          %v461 = vld [vmem:[%s290 + $0x14] sm:$0xf]
          %v462 = vld [vmem:[%s290 + $0x18] sm:$0xf]
          %v463 = vld [vmem:[%s290 + $0x1c] sm:$0xf]
          %v464 = vld [vmem:[%s290 + $0x20] sm:$0xf]
          %v465 = vld [vmem:[%s290 + $0x24] sm:$0xf]
          %v466 = vld [vmem:[%s290 + $0x28] sm:$0xf]
          %v467 = vld [vmem:[%s290 + $0x2c] sm:$0xf]
          %v468 = vld [vmem:[%s290 + $0x30] sm:$0xf]
          %v469 = vld [vmem:[%s290 + $0x34] sm:$0xf]
          %v470 = vld [vmem:[%s290 + $0x38] sm:$0xf]
          %v471 = vld [vmem:[%s290 + $0x3c] sm:$0xf]
          %v472 = vld [vmem:[%s290 + $0x40] sm:$0xf]
          %v473 = vld [vmem:[%s290 + $0x44] sm:$0xf]
          %v474 = vld [vmem:[%s290 + $0x48] sm:$0xf]
          %v475 = vld [vmem:[%s290 + $0x4c] sm:$0xf]
          %v476 = vld [vmem:[%s290 + $0x50] sm:$0xf]
          %v477 = vld [vmem:[%s290 + $0x54] sm:$0xf]
          %v478 = vld [vmem:[%s290 + $0x58] sm:$0xf]
          %v479 = vld [vmem:[%s290 + $0x5c] sm:$0xf]
          %v480 = vld [vmem:[%s290 + $0x60] sm:$0xf]
          %v481 = vld [vmem:[%s290 + $0x64] sm:$0xf]
          %v482 = vld [vmem:[%s290 + $0x68] sm:$0xf]
          %v483 = vld [vmem:[%s290 + $0x6c] sm:$0xf]
          %v484 = vld [vmem:[%s290 + $0x70] sm:$0xf]
          %v485 = vld [vmem:[%s290 + $0x74] sm:$0xf]
          %v486 = vld [vmem:[%s290 + $0x78] sm:$0xf]
          %v487 = vld [vmem:[%s290 + $0x7c] sm:$0xf]
          %v520 = vunpack.c.l.b16 %v424
          %v521 = vunpack.c.h.b16 %v424
          %v522 = vunpack.c.l.b16 %v425
          %v523 = vunpack.c.h.b16 %v425
          %v524 = vunpack.c.l.b16 %v426
          %v525 = vunpack.c.h.b16 %v426
          %v526 = vunpack.c.l.b16 %v427
          %v527 = vunpack.c.h.b16 %v427
          %v528 = vunpack.c.l.b16 %v428
          %v529 = vunpack.c.h.b16 %v428
          %v530 = vunpack.c.l.b16 %v429
          %v531 = vunpack.c.h.b16 %v429
          %v532 = vunpack.c.l.b16 %v430
          %v533 = vunpack.c.h.b16 %v430
          %v534 = vunpack.c.l.b16 %v431
          %v535 = vunpack.c.h.b16 %v431
          %v536 = vunpack.c.l.b16 %v432
          %v537 = vunpack.c.h.b16 %v432
          %v538 = vunpack.c.l.b16 %v433
          %v539 = vunpack.c.h.b16 %v433
          %v540 = vunpack.c.l.b16 %v434
          %v541 = vunpack.c.h.b16 %v434
          %v542 = vunpack.c.l.b16 %v435
          %v543 = vunpack.c.h.b16 %v435
          %v544 = vunpack.c.l.b16 %v436
          %v545 = vunpack.c.h.b16 %v436
          %v546 = vunpack.c.l.b16 %v437
          %v547 = vunpack.c.h.b16 %v437
          %v548 = vunpack.c.l.b16 %v438
          %v549 = vunpack.c.h.b16 %v438
          %v550 = vunpack.c.l.b16 %v439
          %v551 = vunpack.c.h.b16 %v439
          %v552 = vunpack.c.l.b16 %v440
          %v553 = vunpack.c.h.b16 %v440
          %v554 = vunpack.c.l.b16 %v441
          %v555 = vunpack.c.h.b16 %v441
          %v556 = vunpack.c.l.b16 %v442
          %v557 = vunpack.c.h.b16 %v442
          %v558 = vunpack.c.l.b16 %v443
          %v559 = vunpack.c.h.b16 %v443
          %v560 = vunpack.c.l.b16 %v444
          %v561 = vunpack.c.h.b16 %v444
          %v562 = vunpack.c.l.b16 %v445
          %v563 = vunpack.c.h.b16 %v445
          %v564 = vunpack.c.l.b16 %v446
          %v565 = vunpack.c.h.b16 %v446
          %v566 = vunpack.c.l.b16 %v447
          %v567 = vunpack.c.h.b16 %v447
          %v568 = vunpack.c.l.b16 %v448
          %v569 = vunpack.c.h.b16 %v448
          %v570 = vunpack.c.l.b16 %v449
          %v571 = vunpack.c.h.b16 %v449
          %v572 = vunpack.c.l.b16 %v450
          %v573 = vunpack.c.h.b16 %v450
          %v574 = vunpack.c.l.b16 %v451
          %v575 = vunpack.c.h.b16 %v451
          %v576 = vunpack.c.l.b16 %v452
          %v577 = vunpack.c.h.b16 %v452
          %v578 = vunpack.c.l.b16 %v453
          %v579 = vunpack.c.h.b16 %v453
          %v580 = vunpack.c.l.b16 %v454
          %v581 = vunpack.c.h.b16 %v454
          %v582 = vunpack.c.l.b16 %v455
          %v583 = vunpack.c.h.b16 %v455
          %v584 = vpack.c.b16 %v522, %v520
          %v585 = vpack.c.b16 %v523, %v521
          %v586 = vpack.c.b16 %v526, %v524
          %v587 = vpack.c.b16 %v527, %v525
          %v588 = vpack.c.b16 %v530, %v528
          %v589 = vpack.c.b16 %v531, %v529
          %v590 = vpack.c.b16 %v534, %v532
          %v591 = vpack.c.b16 %v535, %v533
          %v592 = vpack.c.b16 %v538, %v536
          %v593 = vpack.c.b16 %v539, %v537
          %v594 = vpack.c.b16 %v542, %v540
          %v595 = vpack.c.b16 %v543, %v541
          %v596 = vpack.c.b16 %v546, %v544
          %v597 = vpack.c.b16 %v547, %v545
          %v598 = vpack.c.b16 %v550, %v548
          %v599 = vpack.c.b16 %v551, %v549
          %v600 = vpack.c.b16 %v554, %v552
          %v601 = vpack.c.b16 %v555, %v553
          %v602 = vpack.c.b16 %v558, %v556
          %v603 = vpack.c.b16 %v559, %v557
          %v604 = vpack.c.b16 %v562, %v560
          %v605 = vpack.c.b16 %v563, %v561
          %v606 = vpack.c.b16 %v566, %v564
          %v607 = vpack.c.b16 %v567, %v565
          %v608 = vpack.c.b16 %v570, %v568
          %v609 = vpack.c.b16 %v571, %v569
          %v610 = vpack.c.b16 %v574, %v572
          %v611 = vpack.c.b16 %v575, %v573
          %v612 = vpack.c.b16 %v578, %v576
          %v613 = vpack.c.b16 %v579, %v577
          %v614 = vpack.c.b16 %v582, %v580
          %v615 = vpack.c.b16 %v583, %v581
          %v680 = vunpack.c.l.b16 %v456
          %v681 = vunpack.c.l.b16 %v457
          %v682 = vunpack.c.l.b16 %v458
          %v683 = vunpack.c.l.b16 %v459
          %v684 = vunpack.c.l.b16 %v460
          %v685 = vunpack.c.l.b16 %v461
          %v686 = vunpack.c.l.b16 %v462
          %v687 = vunpack.c.l.b16 %v463
          %v688 = vunpack.c.l.b16 %v464
          %v689 = vunpack.c.l.b16 %v465
          %v690 = vunpack.c.l.b16 %v466
          %v691 = vunpack.c.l.b16 %v467
          %v692 = vunpack.c.l.b16 %v468
          %v693 = vunpack.c.l.b16 %v469
          %v694 = vunpack.c.l.b16 %v470
          %v695 = vunpack.c.l.b16 %v471
          %v696 = vunpack.c.l.b16 %v472
          %v697 = vunpack.c.l.b16 %v473
          %v698 = vunpack.c.l.b16 %v474
          %v699 = vunpack.c.l.b16 %v475
          %v700 = vunpack.c.l.b16 %v476
          %v701 = vunpack.c.l.b16 %v477
          %v702 = vunpack.c.l.b16 %v478
          %v703 = vunpack.c.l.b16 %v479
          %v704 = vunpack.c.l.b16 %v480
          %v705 = vunpack.c.l.b16 %v481
          %v706 = vunpack.c.l.b16 %v482
          %v707 = vunpack.c.l.b16 %v483
          %v708 = vunpack.c.l.b16 %v484
          %v709 = vunpack.c.l.b16 %v485
          %v710 = vunpack.c.l.b16 %v486
          %v711 = vunpack.c.l.b16 %v487
          %v712 = vpack.c.b16 %v681, %v680
          %v713 = vpack.c.b16 %v683, %v682
          %v714 = vpack.c.b16 %v685, %v684
          %v715 = vpack.c.b16 %v687, %v686
          %v716 = vpack.c.b16 %v689, %v688
          %v717 = vpack.c.b16 %v691, %v690
          %v718 = vpack.c.b16 %v693, %v692
          %v719 = vpack.c.b16 %v695, %v694
          %v720 = vpack.c.b16 %v697, %v696
          %v721 = vpack.c.b16 %v699, %v698
          %v722 = vpack.c.b16 %v701, %v700
          %v723 = vpack.c.b16 %v703, %v702
          %v724 = vpack.c.b16 %v705, %v704
          %v725 = vpack.c.b16 %v707, %v706
          %v726 = vpack.c.b16 %v709, %v708
          %v727 = vpack.c.b16 %v711, %v710
          %744 = vmatpush.bf16.msra.mxu0 %v719
          %745 = vmatpush.bf16.msra.mxu0 %v718
          %746 = vmatpush.bf16.msra.mxu0 %v717
          %747 = vmatpush.bf16.msra.mxu0 %v716
          %748 = vmatpush.bf16.msra.mxu0 %v715
          %749 = vmatpush.bf16.msra.mxu0 %v714
          %750 = vmatpush.bf16.msra.mxu0 %v713
          %751 = vmatpush.bf16.msra.mxu0 %v712
          %752 = vmatmul.bf16.gmra.mxu0 %v584
          %v753 = vpop.f32.mrf.mxu0
          %v754 = vadd.f32 0.0, %v753
          %v755 = vpop.f32.mrf.mxu0
          %v756 = vadd.f32 0.0, %v755
          %757 = vmatmul.bf16.gmra.mxu0 %v586
          %v758 = vpop.f32.mrf.mxu0
          %v759 = vadd.f32 0.0, %v758
          %v760 = vpop.f32.mrf.mxu0
          %v761 = vadd.f32 0.0, %v760
          %762 = vmatmul.bf16.gmra.mxu0 %v588
          %v763 = vpop.f32.mrf.mxu0
          %v764 = vadd.f32 0.0, %v763
          %v765 = vpop.f32.mrf.mxu0
          %v766 = vadd.f32 0.0, %v765
          %767 = vmatmul.bf16.gmra.mxu0 %v590
          %v768 = vpop.f32.mrf.mxu0
          %v769 = vadd.f32 0.0, %v768
          %v770 = vpop.f32.mrf.mxu0
          %v771 = vadd.f32 0.0, %v770
          %772 = vmatmul.bf16.gmra.mxu0 %v592
          %v773 = vpop.f32.mrf.mxu0
          %v774 = vadd.f32 0.0, %v773
          %v775 = vpop.f32.mrf.mxu0
          %v776 = vadd.f32 0.0, %v775
          %777 = vmatmul.bf16.gmra.mxu0 %v594
          %v778 = vpop.f32.mrf.mxu0
          %v779 = vadd.f32 0.0, %v778
          %v780 = vpop.f32.mrf.mxu0
          %v781 = vadd.f32 0.0, %v780
          %782 = vmatmul.bf16.gmra.mxu0 %v596
          %v783 = vpop.f32.mrf.mxu0
          %v784 = vadd.f32 0.0, %v783
          %v785 = vpop.f32.mrf.mxu0
          %v786 = vadd.f32 0.0, %v785
          %787 = vmatmul.bf16.gmra.mxu0 %v598
          %v788 = vpop.f32.mrf.mxu0
          %v789 = vadd.f32 0.0, %v788
          %v790 = vpop.f32.mrf.mxu0
          %v791 = vadd.f32 0.0, %v790
          %792 = vmatmul.bf16.gmra.mxu0 %v600
          %v793 = vpop.f32.mrf.mxu0
          %v794 = vadd.f32 0.0, %v793
          %v795 = vpop.f32.mrf.mxu0
          %v796 = vadd.f32 0.0, %v795
          %797 = vmatmul.bf16.gmra.mxu0 %v602
          %v798 = vpop.f32.mrf.mxu0
          %v799 = vadd.f32 0.0, %v798
          %v800 = vpop.f32.mrf.mxu0
          %v801 = vadd.f32 0.0, %v800
          %802 = vmatmul.bf16.gmra.mxu0 %v604
          %v803 = vpop.f32.mrf.mxu0
          %v804 = vadd.f32 0.0, %v803
          %v805 = vpop.f32.mrf.mxu0
          %v806 = vadd.f32 0.0, %v805
          %807 = vmatmul.bf16.gmra.mxu0 %v606
          %v808 = vpop.f32.mrf.mxu0
          %v809 = vadd.f32 0.0, %v808
          %v810 = vpop.f32.mrf.mxu0
          %v811 = vadd.f32 0.0, %v810
          %812 = vmatmul.bf16.gmra.mxu0 %v608
          %v813 = vpop.f32.mrf.mxu0
          %v814 = vadd.f32 0.0, %v813
          %v815 = vpop.f32.mrf.mxu0
          %v816 = vadd.f32 0.0, %v815
          %817 = vmatmul.bf16.gmra.mxu0 %v610
          %v818 = vpop.f32.mrf.mxu0
          %v819 = vadd.f32 0.0, %v818
          %v820 = vpop.f32.mrf.mxu0
          %v821 = vadd.f32 0.0, %v820
          %822 = vmatmul.bf16.gmra.mxu0 %v612
          %v823 = vpop.f32.mrf.mxu0
          %v824 = vadd.f32 0.0, %v823
          %v825 = vpop.f32.mrf.mxu0
          %v826 = vadd.f32 0.0, %v825
          %827 = vmatmul.bf16.gmra.mxu0 %v614
          %v828 = vpop.f32.mrf.mxu0
          %v829 = vadd.f32 0.0, %v828
          %v830 = vpop.f32.mrf.mxu0
          %v831 = vadd.f32 0.0, %v830
          %832 = vdwg.mxu0
          %833 = vmatpush.bf16.msra.mxu0 %v727
          %834 = vmatpush.bf16.msra.mxu0 %v726
          %835 = vmatpush.bf16.msra.mxu0 %v725
          %836 = vmatpush.bf16.msra.mxu0 %v724
          %837 = vmatpush.bf16.msra.mxu0 %v723
          %838 = vmatpush.bf16.msra.mxu0 %v722
          %839 = vmatpush.bf16.msra.mxu0 %v721
          %840 = vmatpush.bf16.msra.mxu0 %v720
          %841 = vmatmul.bf16.gmra.mxu0 %v585
          %v842 = vpop.f32.mrf.mxu0
          %v843 = vadd.f32 %v754, %v842
          %v844 = vpop.f32.mrf.mxu0
          %v845 = vadd.f32 %v756, %v844
          %846 = vmatmul.bf16.gmra.mxu0 %v587
          %v847 = vpop.f32.mrf.mxu0
          %v848 = vadd.f32 %v759, %v847
          %v849 = vpop.f32.mrf.mxu0
          %v850 = vadd.f32 %v761, %v849
          %851 = vmatmul.bf16.gmra.mxu0 %v589
          %v852 = vpop.f32.mrf.mxu0
          %v853 = vadd.f32 %v764, %v852
          %v854 = vpop.f32.mrf.mxu0
          %v855 = vadd.f32 %v766, %v854
          %856 = vmatmul.bf16.gmra.mxu0 %v591
          %v857 = vpop.f32.mrf.mxu0
          %v858 = vadd.f32 %v769, %v857
          %v859 = vpop.f32.mrf.mxu0
          %v860 = vadd.f32 %v771, %v859
          %861 = vmatmul.bf16.gmra.mxu0 %v593
          %v862 = vpop.f32.mrf.mxu0
          %v863 = vadd.f32 %v774, %v862
          %v864 = vpop.f32.mrf.mxu0
          %v865 = vadd.f32 %v776, %v864
          %866 = vmatmul.bf16.gmra.mxu0 %v595
          %v867 = vpop.f32.mrf.mxu0
          %v868 = vadd.f32 %v779, %v867
          %v869 = vpop.f32.mrf.mxu0
          %v870 = vadd.f32 %v781, %v869
          %871 = vmatmul.bf16.gmra.mxu0 %v597
          %v872 = vpop.f32.mrf.mxu0
          %v873 = vadd.f32 %v784, %v872
          %v874 = vpop.f32.mrf.mxu0
          %v875 = vadd.f32 %v786, %v874
          %876 = vmatmul.bf16.gmra.mxu0 %v599
          %v877 = vpop.f32.mrf.mxu0
          %v878 = vadd.f32 %v789, %v877
          %v879 = vpop.f32.mrf.mxu0
          %v880 = vadd.f32 %v791, %v879
          %881 = vmatmul.bf16.gmra.mxu0 %v601
          %v882 = vpop.f32.mrf.mxu0
          %v883 = vadd.f32 %v794, %v882
          %v884 = vpop.f32.mrf.mxu0
          %v885 = vadd.f32 %v796, %v884
          %886 = vmatmul.bf16.gmra.mxu0 %v603
          %v887 = vpop.f32.mrf.mxu0
          %v888 = vadd.f32 %v799, %v887
          %v889 = vpop.f32.mrf.mxu0
          %v890 = vadd.f32 %v801, %v889
          %891 = vmatmul.bf16.gmra.mxu0 %v605
          %v892 = vpop.f32.mrf.mxu0
          %v893 = vadd.f32 %v804, %v892
          %v894 = vpop.f32.mrf.mxu0
          %v895 = vadd.f32 %v806, %v894
          %896 = vmatmul.bf16.gmra.mxu0 %v607
          %v897 = vpop.f32.mrf.mxu0
          %v898 = vadd.f32 %v809, %v897
          %v899 = vpop.f32.mrf.mxu0
          %v900 = vadd.f32 %v811, %v899
          %901 = vmatmul.bf16.gmra.mxu0 %v609
          %v902 = vpop.f32.mrf.mxu0
          %v903 = vadd.f32 %v814, %v902
          %v904 = vpop.f32.mrf.mxu0
          %v905 = vadd.f32 %v816, %v904
          %906 = vmatmul.bf16.gmra.mxu0 %v611
          %v907 = vpop.f32.mrf.mxu0
          %v908 = vadd.f32 %v819, %v907
          %v909 = vpop.f32.mrf.mxu0
          %v910 = vadd.f32 %v821, %v909
          %911 = vmatmul.bf16.gmra.mxu0 %v613
          %v912 = vpop.f32.mrf.mxu0
          %v913 = vadd.f32 %v824, %v912
          %v914 = vpop.f32.mrf.mxu0
          %v915 = vadd.f32 %v826, %v914
          %916 = vmatmul.bf16.gmra.mxu0 %v615
          %v917 = vpop.f32.mrf.mxu0
          %v918 = vadd.f32 %v829, %v917
          %v919 = vpop.f32.mrf.mxu0
          %v920 = vadd.f32 %v831, %v919
          %921 = vdwg.mxu0
          %v922 = vadd.f32 %v392, %v843
          %v923 = vadd.f32 %v393, %v845
          %v924 = vadd.f32 %v394, %v848
          %v925 = vadd.f32 %v395, %v850
          %v926 = vadd.f32 %v396, %v853
          %v927 = vadd.f32 %v397, %v855
          %v928 = vadd.f32 %v398, %v858
          %v929 = vadd.f32 %v399, %v860
          %v930 = vadd.f32 %v400, %v863
          %v931 = vadd.f32 %v401, %v865
          %v932 = vadd.f32 %v402, %v868
          %v933 = vadd.f32 %v403, %v870
          %v934 = vadd.f32 %v404, %v873
          %v935 = vadd.f32 %v405, %v875
          %v936 = vadd.f32 %v406, %v878
          %v937 = vadd.f32 %v407, %v880
          %v938 = vadd.f32 %v408, %v883
          %v939 = vadd.f32 %v409, %v885
          %v940 = vadd.f32 %v410, %v888
          %v941 = vadd.f32 %v411, %v890
          %v942 = vadd.f32 %v412, %v893
          %v943 = vadd.f32 %v413, %v895
          %v944 = vadd.f32 %v414, %v898
          %v945 = vadd.f32 %v415, %v900
          %v946 = vadd.f32 %v416, %v903
          %v947 = vadd.f32 %v417, %v905
          %v948 = vadd.f32 %v418, %v908
          %v949 = vadd.f32 %v419, %v910
          %v950 = vadd.f32 %v420, %v913
          %v951 = vadd.f32 %v421, %v915
          %v952 = vadd.f32 %v422, %v918
          %v953 = vadd.f32 %v423, %v920
          %954 = vst [vmem:[#allocation2] sm:$0xff] %v922
          %955 = vst [vmem:[#allocation2 + $0x8] sm:$0xff] %v923
          %956 = vst [vmem:[#allocation2 + $0x10] sm:$0xff] %v924
          %957 = vst [vmem:[#allocation2 + $0x18] sm:$0xff] %v925
          %958 = vst [vmem:[#allocation2 + $0x20] sm:$0xff] %v926
          %959 = vst [vmem:[#allocation2 + $0x28] sm:$0xff] %v927
          %960 = vst [vmem:[#allocation2 + $0x30] sm:$0xff] %v928
          %961 = vst [vmem:[#allocation2 + $0x38] sm:$0xff] %v929
          %962 = vst [vmem:[#allocation2 + $0x40] sm:$0xff] %v930
          %963 = vst [vmem:[#allocation2 + $0x48] sm:$0xff] %v931
          %964 = vst [vmem:[#allocation2 + $0x50] sm:$0xff] %v932
          %965 = vst [vmem:[#allocation2 + $0x58] sm:$0xff] %v933
          %966 = vst [vmem:[#allocation2 + $0x60] sm:$0xff] %v934
          %967 = vst [vmem:[#allocation2 + $0x68] sm:$0xff] %v935
          %968 = vst [vmem:[#allocation2 + $0x70] sm:$0xff] %v936
          %969 = vst [vmem:[#allocation2 + $0x78] sm:$0xff] %v937
          %970 = vst [vmem:[#allocation2 + $0x80] sm:$0xff] %v938
          %971 = vst [vmem:[#allocation2 + $0x88] sm:$0xff] %v939
          %972 = vst [vmem:[#allocation2 + $0x90] sm:$0xff] %v940
          %973 = vst [vmem:[#allocation2 + $0x98] sm:$0xff] %v941
          %974 = vst [vmem:[#allocation2 + $0xa0] sm:$0xff] %v942
          %975 = vst [vmem:[#allocation2 + $0xa8] sm:$0xff] %v943
          %976 = vst [vmem:[#allocation2 + $0xb0] sm:$0xff] %v944
          %977 = vst [vmem:[#allocation2 + $0xb8] sm:$0xff] %v945
          %978 = vst [vmem:[#allocation2 + $0xc0] sm:$0xff] %v946
          %979 = vst [vmem:[#allocation2 + $0xc8] sm:$0xff] %v947
          %980 = vst [vmem:[#allocation2 + $0xd0] sm:$0xff] %v948
          %981 = vst [vmem:[#allocation2 + $0xd8] sm:$0xff] %v949
          %982 = vst [vmem:[#allocation2 + $0xe0] sm:$0xff] %v950
          %983 = vst [vmem:[#allocation2 + $0xe8] sm:$0xff] %v951
          %984 = vst [vmem:[#allocation2 + $0xf0] sm:$0xff] %v952
          %985 = vst [vmem:[#allocation2 + $0xf8] sm:$0xff] %v953
        $region44: #{tpu_custom_call.1} parent=27 // pred_fallthru
          _
        %p986 = scmp.eq.s32.totalorder %s47, 1
        // Predicated region
        $region45: #{tpu_custom_call.1} parent=27 // pred_check
          %p987 = pneg %p986
        $region46: #{tpu_custom_call.1} parent=27 // pred_check_branch
          %989 = sbr.rel (%p987) target = $region48
        $region47: #{tpu_custom_call.1} parent=27 // pred_region
          %v990 = vld [vmem:[#allocation2] sm:$0xff]
          %v991 = vld [vmem:[#allocation2 + $0x8] sm:$0xff]
          %v992 = vld [vmem:[#allocation2 + $0x10] sm:$0xff]
          %v993 = vld [vmem:[#allocation2 + $0x18] sm:$0xff]
          %v994 = vld [vmem:[#allocation2 + $0x20] sm:$0xff]
          %v995 = vld [vmem:[#allocation2 + $0x28] sm:$0xff]
          %v996 = vld [vmem:[#allocation2 + $0x30] sm:$0xff]
          %v997 = vld [vmem:[#allocation2 + $0x38] sm:$0xff]
          %v998 = vld [vmem:[#allocation2 + $0x40] sm:$0xff]
          %v999 = vld [vmem:[#allocation2 + $0x48] sm:$0xff]
          %v1000 = vld [vmem:[#allocation2 + $0x50] sm:$0xff]
          %v1001 = vld [vmem:[#allocation2 + $0x58] sm:$0xff]
          %v1002 = vld [vmem:[#allocation2 + $0x60] sm:$0xff]
          %v1003 = vld [vmem:[#allocation2 + $0x68] sm:$0xff]
          %v1004 = vld [vmem:[#allocation2 + $0x70] sm:$0xff]
          %v1005 = vld [vmem:[#allocation2 + $0x78] sm:$0xff]
          %v1006 = vld [vmem:[#allocation2 + $0x80] sm:$0xff]
          %v1007 = vld [vmem:[#allocation2 + $0x88] sm:$0xff]
          %v1008 = vld [vmem:[#allocation2 + $0x90] sm:$0xff]
          %v1009 = vld [vmem:[#allocation2 + $0x98] sm:$0xff]
          %v1010 = vld [vmem:[#allocation2 + $0xa0] sm:$0xff]
          %v1011 = vld [vmem:[#allocation2 + $0xa8] sm:$0xff]
          %v1012 = vld [vmem:[#allocation2 + $0xb0] sm:$0xff]
          %v1013 = vld [vmem:[#allocation2 + $0xb8] sm:$0xff]
          %v1014 = vld [vmem:[#allocation2 + $0xc0] sm:$0xff]
          %v1015 = vld [vmem:[#allocation2 + $0xc8] sm:$0xff]
          %v1016 = vld [vmem:[#allocation2 + $0xd0] sm:$0xff]
          %v1017 = vld [vmem:[#allocation2 + $0xd8] sm:$0xff]
          %v1018 = vld [vmem:[#allocation2 + $0xe0] sm:$0xff]
          %v1019 = vld [vmem:[#allocation2 + $0xe8] sm:$0xff]
          %v1020 = vld [vmem:[#allocation2 + $0xf0] sm:$0xff]
          %v1021 = vld [vmem:[#allocation2 + $0xf8] sm:$0xff]
          %v1022 = vpack.c.bf16 %v990, %v990
          %v1023 = vpack.c.bf16 %v991, %v991
          %v1024 = vpack.c.bf16 %v992, %v992
          %v1025 = vpack.c.bf16 %v993, %v993
          %v1026 = vpack.c.bf16 %v994, %v994
          %v1027 = vpack.c.bf16 %v995, %v995
          %v1028 = vpack.c.bf16 %v996, %v996
          %v1029 = vpack.c.bf16 %v997, %v997
          %v1030 = vpack.c.bf16 %v998, %v998
          %v1031 = vpack.c.bf16 %v999, %v999
          %v1032 = vpack.c.bf16 %v1000, %v1000
          %v1033 = vpack.c.bf16 %v1001, %v1001
          %v1034 = vpack.c.bf16 %v1002, %v1002
          %v1035 = vpack.c.bf16 %v1003, %v1003
          %v1036 = vpack.c.bf16 %v1004, %v1004
          %v1037 = vpack.c.bf16 %v1005, %v1005
          %v1038 = vpack.c.bf16 %v1006, %v1006
          %v1039 = vpack.c.bf16 %v1007, %v1007
          %v1040 = vpack.c.bf16 %v1008, %v1008
          %v1041 = vpack.c.bf16 %v1009, %v1009
          %v1042 = vpack.c.bf16 %v1010, %v1010
          %v1043 = vpack.c.bf16 %v1011, %v1011
          %v1044 = vpack.c.bf16 %v1012, %v1012
          %v1045 = vpack.c.bf16 %v1013, %v1013
          %v1046 = vpack.c.bf16 %v1014, %v1014
          %v1047 = vpack.c.bf16 %v1015, %v1015
          %v1048 = vpack.c.bf16 %v1016, %v1016
          %v1049 = vpack.c.bf16 %v1017, %v1017
          %v1050 = vpack.c.bf16 %v1018, %v1018
          %v1051 = vpack.c.bf16 %v1019, %v1019
          %v1052 = vpack.c.bf16 %v1020, %v1020
          %v1053 = vpack.c.bf16 %v1021, %v1021
          %1054 = vst [vmem:[%s316] sm:$0xf] %v1022
          %1055 = vst [vmem:[%s316 + $0x4] sm:$0xf] %v1023
          %1056 = vst [vmem:[%s316 + $0x8] sm:$0xf] %v1024
          %1057 = vst [vmem:[%s316 + $0xc] sm:$0xf] %v1025
          %1058 = vst [vmem:[%s316 + $0x10] sm:$0xf] %v1026
          %1059 = vst [vmem:[%s316 + $0x14] sm:$0xf] %v1027
          %1060 = vst [vmem:[%s316 + $0x18] sm:$0xf] %v1028
          %1061 = vst [vmem:[%s316 + $0x1c] sm:$0xf] %v1029
          %1062 = vst [vmem:[%s316 + $0x20] sm:$0xf] %v1030
          %1063 = vst [vmem:[%s316 + $0x24] sm:$0xf] %v1031
          %1064 = vst [vmem:[%s316 + $0x28] sm:$0xf] %v1032
          %1065 = vst [vmem:[%s316 + $0x2c] sm:$0xf] %v1033
          %1066 = vst [vmem:[%s316 + $0x30] sm:$0xf] %v1034
          %1067 = vst [vmem:[%s316 + $0x34] sm:$0xf] %v1035
          %1068 = vst [vmem:[%s316 + $0x38] sm:$0xf] %v1036
          %1069 = vst [vmem:[%s316 + $0x3c] sm:$0xf] %v1037
          %1070 = vst [vmem:[%s316 + $0x40] sm:$0xf] %v1038
          %1071 = vst [vmem:[%s316 + $0x44] sm:$0xf] %v1039
          %1072 = vst [vmem:[%s316 + $0x48] sm:$0xf] %v1040
          %1073 = vst [vmem:[%s316 + $0x4c] sm:$0xf] %v1041
          %1074 = vst [vmem:[%s316 + $0x50] sm:$0xf] %v1042
          %1075 = vst [vmem:[%s316 + $0x54] sm:$0xf] %v1043
          %1076 = vst [vmem:[%s316 + $0x58] sm:$0xf] %v1044
          %1077 = vst [vmem:[%s316 + $0x5c] sm:$0xf] %v1045
          %1078 = vst [vmem:[%s316 + $0x60] sm:$0xf] %v1046
          %1079 = vst [vmem:[%s316 + $0x64] sm:$0xf] %v1047
          %1080 = vst [vmem:[%s316 + $0x68] sm:$0xf] %v1048
          %1081 = vst [vmem:[%s316 + $0x6c] sm:$0xf] %v1049
          %1082 = vst [vmem:[%s316 + $0x70] sm:$0xf] %v1050
          %1083 = vst [vmem:[%s316 + $0x74] sm:$0xf] %v1051
          %1084 = vst [vmem:[%s316 + $0x78] sm:$0xf] %v1052
          %1085 = vst [vmem:[%s316 + $0x7c] sm:$0xf] %v1053
          %v1086 = vadd.f32 %v990, %v991
          %v1087 = vadd.f32 %v1086, %v992
          %v1088 = vadd.f32 %v1087, %v993
          %v1089 = vadd.f32 %v1088, %v994
          %v1090 = vadd.f32 %v1089, %v995
          %v1091 = vadd.f32 %v1090, %v996
          %v1092 = vadd.f32 %v1091, %v997
          %v1093 = vadd.f32 %v1092, %v998
          %v1094 = vadd.f32 %v1093, %v999
          %v1095 = vadd.f32 %v1094, %v1000
          %v1096 = vadd.f32 %v1095, %v1001
          %v1097 = vadd.f32 %v1096, %v1002
          %v1098 = vadd.f32 %v1097, %v1003
          %v1099 = vadd.f32 %v1098, %v1004
          %v1100 = vadd.f32 %v1099, %v1005
          %v1101 = vadd.f32 %v1100, %v1006
          %v1102 = vadd.f32 %v1101, %v1007
          %v1103 = vadd.f32 %v1102, %v1008
          %v1104 = vadd.f32 %v1103, %v1009
          %v1105 = vadd.f32 %v1104, %v1010
          %v1106 = vadd.f32 %v1105, %v1011
          %v1107 = vadd.f32 %v1106, %v1012
          %v1108 = vadd.f32 %v1107, %v1013
          %v1109 = vadd.f32 %v1108, %v1014
          %v1110 = vadd.f32 %v1109, %v1015
          %v1111 = vadd.f32 %v1110, %v1016
          %v1112 = vadd.f32 %v1111, %v1017
          %v1113 = vadd.f32 %v1112, %v1018
          %v1114 = vadd.f32 %v1113, %v1019
          %v1115 = vadd.f32 %v1114, %v1020
          %v1116 = vadd.f32 %v1115, %v1021
          %v1117 = vrot.slane %v1116, 4
          %v1118 = vadd.f32 %v1116, %v1117
          %v1119 = vrot.slane %v1118, 2
          %v1120 = vadd.f32 %v1118, %v1119
          %v1121 = vrot.slane %v1120, 1
          %v1122 = vadd.f32 %v1120, %v1121
          %1123 = vst [vmem:[%s323] sm:$0x1] %v1122
          %v1124 = vmul.f32 %v990, %v990
          %v1125 = vmul.f32 %v991, %v991
          %v1126 = vmul.f32 %v992, %v992
          %v1127 = vmul.f32 %v993, %v993
          %v1128 = vmul.f32 %v994, %v994
          %v1129 = vmul.f32 %v995, %v995
          %v1130 = vmul.f32 %v996, %v996
          %v1131 = vmul.f32 %v997, %v997
          %v1132 = vmul.f32 %v998, %v998
          %v1133 = vmul.f32 %v999, %v999
          %v1134 = vmul.f32 %v1000, %v1000
          %v1135 = vmul.f32 %v1001, %v1001
          %v1136 = vmul.f32 %v1002, %v1002
          %v1137 = vmul.f32 %v1003, %v1003
          %v1138 = vmul.f32 %v1004, %v1004
          %v1139 = vmul.f32 %v1005, %v1005
          %v1140 = vmul.f32 %v1006, %v1006
          %v1141 = vmul.f32 %v1007, %v1007
          %v1142 = vmul.f32 %v1008, %v1008
          %v1143 = vmul.f32 %v1009, %v1009
          %v1144 = vmul.f32 %v1010, %v1010
          %v1145 = vmul.f32 %v1011, %v1011
          %v1146 = vmul.f32 %v1012, %v1012
          %v1147 = vmul.f32 %v1013, %v1013
          %v1148 = vmul.f32 %v1014, %v1014
          %v1149 = vmul.f32 %v1015, %v1015
          %v1150 = vmul.f32 %v1016, %v1016
          %v1151 = vmul.f32 %v1017, %v1017
          %v1152 = vmul.f32 %v1018, %v1018
          %v1153 = vmul.f32 %v1019, %v1019
          %v1154 = vmul.f32 %v1020, %v1020
          %v1155 = vmul.f32 %v1021, %v1021
          %v1156 = vadd.f32 %v1124, %v1125
          %v1157 = vadd.f32 %v1156, %v1126
          %v1158 = vadd.f32 %v1157, %v1127
          %v1159 = vadd.f32 %v1158, %v1128
          %v1160 = vadd.f32 %v1159, %v1129
          %v1161 = vadd.f32 %v1160, %v1130
          %v1162 = vadd.f32 %v1161, %v1131
          %v1163 = vadd.f32 %v1162, %v1132
          %v1164 = vadd.f32 %v1163, %v1133
          %v1165 = vadd.f32 %v1164, %v1134
          %v1166 = vadd.f32 %v1165, %v1135
          %v1167 = vadd.f32 %v1166, %v1136
          %v1168 = vadd.f32 %v1167, %v1137
          %v1169 = vadd.f32 %v1168, %v1138
          %v1170 = vadd.f32 %v1169, %v1139
          %v1171 = vadd.f32 %v1170, %v1140
          %v1172 = vadd.f32 %v1171, %v1141
          %v1173 = vadd.f32 %v1172, %v1142
          %v1174 = vadd.f32 %v1173, %v1143
          %v1175 = vadd.f32 %v1174, %v1144
          %v1176 = vadd.f32 %v1175, %v1145
          %v1177 = vadd.f32 %v1176, %v1146
          %v1178 = vadd.f32 %v1177, %v1147
          %v1179 = vadd.f32 %v1178, %v1148
          %v1180 = vadd.f32 %v1179, %v1149
          %v1181 = vadd.f32 %v1180, %v1150
          %v1182 = vadd.f32 %v1181, %v1151
          %v1183 = vadd.f32 %v1182, %v1152
          %v1184 = vadd.f32 %v1183, %v1153
          %v1185 = vadd.f32 %v1184, %v1154
          %v1186 = vadd.f32 %v1185, %v1155
          %v1187 = vrot.slane %v1186, 4
          %v1188 = vadd.f32 %v1186, %v1187
          %v1189 = vrot.slane %v1188, 2
          %v1190 = vadd.f32 %v1188, %v1189
          %v1191 = vrot.slane %v1190, 1
          %v1192 = vadd.f32 %v1190, %v1191
          %1193 = vst [vmem:[%s323 + $0x1] sm:$0x1] %v1192
        $region48: #{tpu_custom_call.1} parent=27 // pred_fallthru
          _
        %s1194 = sand.u32 %s148, 1
        %s1195 = scalar_lea.sflag [#allocation8], %s1194
        %s1196 = sand.u32 %s148, 1
        %s1197 = smul.addr %s1196, 128
        %s1198 = scalar_lea.vmem [#allocation11], %s1197
        %s1199 = sand.u32 %s174, 1
        %s1200 = scalar_lea.sflag [#allocation13], %s1199
        %s1201 = sand.u32 %s174, 1
        %s1202 = smul.addr %s1201, 8
        %s1203 = scalar_lea.vmem [#allocation12], %s1202
        // Predicated region
        $region49: #{tpu_custom_call.1} parent=27 // pred_check
          %p1204 = pneg %p158
        $region50: #{tpu_custom_call.1} parent=27 // pred_check_branch
          %1206 = sbr.rel (%p1204) target = $region52
        $region51: #{tpu_custom_call.1} parent=27 // pred_region
          %s1207 = smul.u32 32, %s46
          %1209 = vsyncadd %s1195, 0
          %s1210 = smul.addr %s1207, 4
          %s1211 = scalar_lea.hbm %s4, %s1210
          %s1212 = sshll.u32 %s1198, 4
          %s1213 = int_to_ptr.vmem [resolvable:$true] %s1212
          %s1214 = sshll.u32 %s1211, 4
          %s1215 = int_to_ptr.hbm [resolvable:$true] %s1214
          %1220 = dma.vmem_to_hbm [thread:$0]  %s1213, 2048, %s1215, %s1195, 64, 64, 4
        $region52: #{tpu_custom_call.1} parent=27 // pred_fallthru
          _
        // Predicated region
        $region53: #{tpu_custom_call.1} parent=27 // pred_check
          %p1221 = pneg %p184
        $region54: #{tpu_custom_call.1} parent=27 // pred_check_branch
          %1223 = sbr.rel (%p1221) target = $region56
        $region55: #{tpu_custom_call.1} parent=27 // pred_region
          %1225 = vsyncadd %s1200, 0
          %s1226 = smul.addr %s46, 8
          %s1227 = scalar_lea.hbm %s5, %s1226
          %s1229 = sshll.u32 %s1203, 4
          %s1230 = int_to_ptr.vmem [resolvable:$true] %s1229
          %s1231 = sshll.u32 %s1227, 4
          %s1232 = int_to_ptr.hbm [resolvable:$true] %s1231
          %1234 = dma.vmem_to_hbm [thread:$0]  %s1230, 128, %s1232, %s1200
        $region56: #{tpu_custom_call.1} parent=27 // pred_fallthru
          _
      $region28: #{tpu_custom_call.1} parent=5 // pred_fallthru
        _
      %p1235 = scmp.le.s32.totalorder 2, %s37
      // Predicated region
      $region57: #{tpu_custom_call.1} parent=5 // pred_check
        %p1236 = pneg %p1235
      $region58: #{tpu_custom_call.1} parent=5 // pred_check_branch
        %1238 = sbr.rel (%p1236) target = $region60
      $region59: #{tpu_custom_call.1} parent=5 // pred_region
        %s1239 = ssub.s32 %s37, 2
        // Predicated region
        $region61: #{tpu_custom_call.1} parent=59 // pred_check
          %p1240 = pneg %p164
        $region62: #{tpu_custom_call.1} parent=59 // pred_check_branch
          %1242 = sbr.rel (%p1240) target = $region64
        $region63: #{tpu_custom_call.1} parent=59 // pred_region
          %s1243 = sand.u32 %s149, 1
          %s1244 = scalar_lea.sflag [#allocation8], %s1243
          %s1245 = sand.u32 %s149, 1
          %s1246 = smul.addr %s1245, 128
          %s1247 = scalar_lea.vmem [#allocation11], %s1246
          %1249 = dma.done %s1244, 2048
        $region64: #{tpu_custom_call.1} parent=59 // pred_fallthru
          _
        // Predicated region
        $region65: #{tpu_custom_call.1} parent=59 // pred_check
          %p1250 = pneg %p190
        $region66: #{tpu_custom_call.1} parent=59 // pred_check_branch
          %1252 = sbr.rel (%p1250) target = $region68
        $region67: #{tpu_custom_call.1} parent=59 // pred_region
          %s1253 = sand.u32 %s175, 1
          %s1254 = scalar_lea.sflag [#allocation13], %s1253
          %s1255 = sand.u32 %s175, 1
          %s1256 = smul.addr %s1255, 8
          %s1257 = scalar_lea.vmem [#allocation12], %s1256
          %1259 = dma.done %s1254, 128
        $region68: #{tpu_custom_call.1} parent=59 // pred_fallthru
          _
      $region60: #{tpu_custom_call.1} parent=5 // pred_fallthru
        _
    $region6: #{tpu_custom_call.1} parent=1 // loop_footer
      %s41 = sadd.s32 1, %s37
    $region7: #{tpu_custom_call.1} parent=1 // loop_footer_branch
      %36 = sbr.rel target = $region3
    $region8: #{tpu_custom_call.1} parent=1 // loop_exit
      _
    %1260 = vsyncpa [#allocation7], 1
    %s1261 = scalar_lea.sflag [#allocation7], 1
    %1262 = vsyncpa %s1261, 1
    %1263 = vsyncpa [#allocation10], 1
    %s1264 = scalar_lea.sflag [#allocation10], 1
    %1265 = vsyncpa %s1264, 1
    %1266 = vsyncpa [#allocation8], 1
    %s1267 = scalar_lea.sflag [#allocation8], 1
    %1268 = vsyncpa %s1267, 1
    %1269 = vsyncpa [#allocation13], 1
    %s1270 = scalar_lea.sflag [#allocation13], 1
    %1271 = vsyncpa %s1270, 1

</llo_original>
